<compile_context>
chip_gen: v5e
topology: v5e:2x2
jax: 0.10.0
libtpu: 0.0.40
codegen_flags: <defaults>
</compile_context>

<pallas_src>
import functools

import jax
import jax.numpy as jnp
from jax import lax
from jax.experimental import pallas as pl
from jax.experimental.pallas import tpu as pltpu

# torch.qint8 -> 8-bit signed
Q_MIN = -128
Q_MAX = 127

NUM_CORES = 2           # v7x has 2 TensorCores/chip; harmless (sequential) on v5e/v6e
MAX_BLOCK_ROWS = 1024   # 1024 x 512 x 4B = 2 MiB f32 tile
_LANE_WIDTHS = (512, 256, 128)      # lane-dense column widths (multiples of 128)
_SUBLANE = {4: 8, 2: 16, 1: 32}     # sublane packing multiple per dtype itemsize


def _cdiv(a, b):
    return -(-a // b)


def _round_up(a, b):
    return _cdiv(a, b) * b


# ---------------------------------------------------------------------------
# Kernel 1: global min / max reduction, split across 2 TensorCores.
# The (8, cols) running min/max lives directly in the per-core output block
# (resident across the inner "arbitrary" axis); each step folds its tile to
# (8, cols) with a VPU-only reduce over the leading axis.  The final cross-lane
# reduce (2*8*cols elements) happens in the wrapper and fuses with the scalar
# qparams math.
# ---------------------------------------------------------------------------
def _minmax_kernel(x_ref, mn_ref, mx_ref, *, block_rows, rows, core_off, ragged):
    i = pl.program_id(1)

    @pl.when(i == 0)
    def _():
        mn_ref[...] = jnp.full(mn_ref.shape, jnp.inf, mn_ref.dtype)
        mx_ref[...] = jnp.full(mx_ref.shape, -jnp.inf, mx_ref.dtype)

    x = x_ref[...].astype(jnp.float32)
    cols = x.shape[1]

    if ragged:
        # Partial last row-block: rows >= `rows` contain garbage from the
        # partial DMA -> force them to +/-inf before reducing.
        b = pl.program_id(0) * core_off + i        # absolute row-block index
        rem = rows - b * block_rows                # valid rows in this block
        row_id = lax.broadcasted_iota(jnp.int32, (block_rows, cols), 0)
        valid = row_id < rem
        x_mn = jnp.where(valid, x, jnp.inf)
        x_mx = jnp.where(valid, x, -jnp.inf)
    else:
        x_mn = x_mx = x

    # Fold (block_rows, cols) -> (8, cols): reduce over the leading axis of the
    # (k, 8, cols) view (pure VPU tree, no XLU, tiny stores).
    k = block_rows // 8
    mn_part = jnp.min(x_mn.reshape(k, 8, cols), axis=0)
    mx_part = jnp.max(x_mx.reshape(k, 8, cols), axis=0)
    mn_ref[...] = jnp.minimum(mn_ref[...], mn_part)
    mx_ref[...] = jnp.maximum(mx_ref[...], mx_part)


def _minmax_pallas(x2d, block_rows):
    rows, cols = x2d.shape
    nblocks = _cdiv(rows, block_rows)
    bpc = _cdiv(nblocks, NUM_CORES)     # row-blocks per core
    core_off = nblocks - bpc            # core 1's first block (may overlap core 0)
    ragged = (rows % block_rows) != 0

    kernel = functools.partial(
        _minmax_kernel,
        block_rows=block_rows, rows=rows, core_off=core_off, ragged=ragged)

    mn, mx = pl.pallas_call(
        kernel,
        out_shape=(
            jax.ShapeDtypeStruct((NUM_CORES * 8, cols), jnp.float32),
            jax.ShapeDtypeStruct((NUM_CORES * 8, cols), jnp.float32),
        ),
        grid=(NUM_CORES, bpc),
        in_specs=[
            pl.BlockSpec((block_rows, cols), lambda c, i: (c * core_off + i, 0)),
        ],
        out_specs=(
            pl.BlockSpec((8, cols), lambda c, i: (c, 0)),
            pl.BlockSpec((8, cols), lambda c, i: (c, 0)),
        ),
        compiler_params=pltpu.CompilerParams(
            dimension_semantics=("parallel", "arbitrary")),
    )(x2d)
    # Tiny final cross-lane reduce; fuses with the scalar qparams math in XLA.
    return jnp.min(mn), jnp.max(mx)


# ---------------------------------------------------------------------------
# Kernel 2: fake_quantize_per_tensor_affine (streaming elementwise hot path).
# params = [scale, inv_scale, zero_point] (12 B) in SMEM; data streams through
# lane-dense VMEM blocks; grid axis is "parallel" (megacore split on v7x).
# ---------------------------------------------------------------------------
def _fake_quant_kernel(params_ref, x_ref, o_ref):
    scale = params_ref[0]
    inv_scale = params_ref[1]
    zp = params_ref[2]
    x = x_ref[...].astype(jnp.float32)
    # round half-to-even == std::nearbyint used by torch fake_quantize
    q = jnp.clip(jnp.round(x * inv_scale + zp), float(Q_MIN), float(Q_MAX))
    o_ref[...] = ((q - zp) * scale).astype(o_ref.dtype)


def _fake_quant_pallas(x2d, params, block_rows):
    rows, cols = x2d.shape
    nblocks = _cdiv(rows, block_rows)
    return pl.pallas_call(
        _fake_quant_kernel,
        out_shape=jax.ShapeDtypeStruct(x2d.shape, x2d.dtype),
        grid=(nblocks,),
        in_specs=[
            pl.BlockSpec(memory_space=pltpu.MemorySpace.SMEM),   # (3,) params
            pl.BlockSpec((block_rows, cols), lambda i: (i, 0)),
        ],
        out_specs=pl.BlockSpec((block_rows, cols), lambda i: (i, 0)),
        compiler_params=pltpu.CompilerParams(
            dimension_semantics=("parallel",)),
    )(params, x2d)


# ---------------------------------------------------------------------------
# Wrapper reproducing MinMaxObserver.forward (observe=True, fake_quant=True).
# ---------------------------------------------------------------------------
def _choose_layout(n, itemsize):
    """Pick a lane-dense column width; copy-free whenever n divides one of the
    supported widths (covers most activation shapes)."""
    for cols in _LANE_WIDTHS:
        if n % cols == 0:
            return cols, 0
    cols = _LANE_WIDTHS[-1]
    return cols, _round_up(n, cols) - n


def min_max_observer_forward(x, min_val_state, max_val_state,
                             max_block_rows=MAX_BLOCK_ROWS):
    """Returns (out, new_min_val, new_max_val, scale, zero_point)."""
    orig_shape = x.shape
    n = x.size
    itemsize = jnp.dtype(x.dtype).itemsize
    cols, pad = _choose_layout(n, itemsize)

    flat = x.reshape(-1)
    if pad:
        # Fallback only when n is not a multiple of any supported lane width:
        # <128 edge elements (neutral for min/max, sliced away after fake-quant).
        flat = jnp.pad(flat, (0, pad), mode="edge")
    rows = (n + pad) // cols
    sub = _SUBLANE.get(itemsize, 8)
    block_rows = min(max_block_rows, _round_up(rows, sub))
    x2d = flat.reshape(rows, cols)

    # --- observe: global aminmax (2-core Pallas reduction) ---
    batch_min, batch_max = _minmax_pallas(x2d, block_rows)
    min_val = jnp.minimum(batch_min, min_val_state)
    max_val = jnp.maximum(batch_max, max_val_state)

    # --- per-tensor affine qparams (tiny scalar glue) ---
    max_c = jnp.maximum(max_val, 0.0)
    min_c = jnp.minimum(min_val, 0.0)
    scale = (max_c - min_c) / float(Q_MAX - Q_MIN)
    # guard against degenerate all-zero range (matches torch observer eps clamp)
    scale = jnp.maximum(scale, jnp.float32(jnp.finfo(jnp.float32).eps))
    inv_scale = 1.0 / scale
    zero_point_f = Q_MIN - min_c / scale
    # The provided module does `self.zero_point.copy_(zero_point)` with no
    # round: float->int32 copy_ truncates toward zero, reproduced here; clip
    # protects fake_quantize's valid range.
    zero_point = jnp.clip(zero_point_f, Q_MIN, Q_MAX).astype(jnp.int32)

    # --- fake quantize (streaming elementwise Pallas kernel) ---
    params = jnp.stack(
        [scale, inv_scale, zero_point.astype(jnp.float32)]).astype(jnp.float32)
    out2d = _fake_quant_pallas(x2d, params, block_rows)
    out = out2d.reshape(-1)
    if pad:
        out = out[:n]
    out = out.reshape(orig_shape)
    return out, min_val, max_val, scale, zero_point


# ---------------------------------------------------------------------------
# Self-check against a plain-JAX reference of the same math.
# ---------------------------------------------------------------------------
def _reference(x, min_state, max_state):
    mn = jnp.minimum(jnp.min(x).astype(jnp.float32), min_state)
    mx = jnp.maximum(jnp.max(x).astype(jnp.float32), max_state)
    scale = (jnp.maximum(mx, 0.0) - jnp.minimum(mn, 0.0)) / float(Q_MAX - Q_MIN)
    scale = jnp.maximum(scale, jnp.float32(jnp.finfo(jnp.float32).eps))
    zp = jnp.clip(Q_MIN - jnp.minimum(mn, 0.0) / scale, Q_MIN, Q_MAX).astype(jnp.int32)
    zpf = zp.astype(jnp.float32)
    xf = x.astype(jnp.float32)
    out = (jnp.clip(jnp.round(xf * (1.0 / scale) + zpf), Q_MIN, Q_MAX) - zpf) * scale
    return out.astype(x.dtype), mn, mx, scale, zp


def _check(x, min0, max0, max_block_rows=MAX_BLOCK_ROWS):
    out, mn, mx, sc, zp = min_max_observer_forward(
        x, min0, max0, max_block_rows=max_block_rows)
    jax.block_until_ready(out)
    ref_out, ref_mn, ref_mx, ref_sc, ref_zp = _reference(x, min0, max0)
    assert jnp.allclose(mn, ref_mn), (mn, ref_mn)
    assert jnp.allclose(mx, ref_mx), (mx, ref_mx)
    assert jnp.allclose(sc, ref_sc, rtol=1e-6), (sc, ref_sc)
    assert int(zp) == int(ref_zp), (zp, ref_zp)
    err = jnp.abs(out.astype(jnp.float32) - ref_out.astype(jnp.float32))
    # allow rare round-to-nearest ties at quant boundaries to resolve either way
    assert float(jnp.max(err)) <= float(sc) + 1e-6
    assert float(jnp.mean(err <= 1e-5)) >= 0.99


if __name__ == "__main__":
    key = jax.random.PRNGKey(0)
    k1, k2, k3 = jax.random.split(key, 3)
    inf = jnp.float32(jnp.inf)

    # Primary: NCHW activation, fresh observer state (copy-free aligned path,
    # partial row-block masking exercised since rows=4 < block_rows=8).
    x1 = jax.random.normal(k1, (2, 4, 16, 16), dtype=jnp.float32)
    _check(x1, inf, -inf)

    # Unaligned element count (n % 128 != 0): pad/slice fallback + two distinct
    # row-blocks split across the two "cores" + ragged last block.
    x2 = 3.0 * jax.random.normal(k2, (3, 5, 7, 11), dtype=jnp.float32)
    _check(x2, inf, -inf, max_block_rows=8)

    # Multi-block accumulation per core (inner "arbitrary" loop) + pre-existing
    # running min/max state that dominates the batch statistics.
    x3 = jax.random.normal(k3, (5, 4096), dtype=jnp.float32)
    _check(x3, jnp.float32(-10.0), jnp.float32(10.0), max_block_rows=8)

    print("KERNEL_OK")
</pallas_src>

<mosaic_0001>
module attributes {stable_mosaic.version = 11 : i64} {
  func.func @_minmax_kernel(%arg0: i32, %arg1: i32, %arg2: memref<8x512xf32, #tpu.memory_space<vmem>>, %arg3: memref<8x512xf32, #tpu.memory_space<vmem>>, %arg4: memref<8x512xf32, #tpu.memory_space<vmem>>) attributes {dimension_semantics = [#tpu.dimension_semantics<parallel>, #tpu.dimension_semantics<arbitrary>], iteration_bounds = array<i64: 2, 1>, scalar_prefetch = 0 : i64, scratch_operands = 0 : i64, tpu.core_type = #tpu.core_type<tc>, window_params = [{transform_indices = @transform_0, window_bounds = array<i64: 8, 512>}, {transform_indices = @transform_1, window_bounds = array<i64: 8, 512>}, {transform_indices = @transform_2, window_bounds = array<i64: 8, 512>}]} {
    %c0_i32 = arith.constant 0 : i32
    %0 = arith.cmpi eq, %arg1, %c0_i32 : i32
    %1 = arith.extui %0 : i1 to i32
    %c0_i32_0 = arith.constant 0 : i32
    %2 = arith.cmpi ne, %1, %c0_i32_0 : i32
    scf.if %2 {
      %cst_14 = arith.constant 0x7F800000 : f32
      %25 = vector.broadcast %cst_14 : f32 to vector<8x512xf32>
      %c0_15 = arith.constant 0 : index
      %c0_16 = arith.constant 0 : index
      %26 = vector.load %arg3[%c0_15, %c0_16] : memref<8x512xf32, #tpu.memory_space<vmem>>, vector<8x512xf32>
      tpu.vector_store %arg3[%c0_15, %c0_16], %25 {strides = array<i32>} : memref<8x512xf32, #tpu.memory_space<vmem>>, vector<8x512xf32>,
      %cst_17 = arith.constant 0xFF800000 : f32
      %27 = vector.broadcast %cst_17 : f32 to vector<8x512xf32>
      %c0_18 = arith.constant 0 : index
      %c0_19 = arith.constant 0 : index
      %28 = vector.load %arg4[%c0_18, %c0_19] : memref<8x512xf32, #tpu.memory_space<vmem>>, vector<8x512xf32>
      tpu.vector_store %arg4[%c0_18, %c0_19], %27 {strides = array<i32>} : memref<8x512xf32, #tpu.memory_space<vmem>>, vector<8x512xf32>,
    } else {
    }
    %c0 = arith.constant 0 : index
    %c0_1 = arith.constant 0 : index
    %3 = vector.load %arg2[%c0, %c0_1] : memref<8x512xf32, #tpu.memory_space<vmem>>, vector<8x512xf32>
    %c0_i32_2 = arith.constant 0 : i32
    %4 = arith.muli %arg0, %c0_i32_2 : i32
    %5 = arith.addi %4, %arg1 : i32
    %c8_i32 = arith.constant 8 : i32
    %6 = arith.muli %5, %c8_i32 : i32
    %c4_i32 = arith.constant 4 : i32
    %7 = arith.subi %c4_i32, %6 : i32
    %8 = tpu.iota {dimensions = array<i32: 0>} : vector<8x512xi32>
    %9 = vector.broadcast %7 : i32 to vector<8x512xi32>
    %10 = arith.cmpi slt, %8, %9 : vector<8x512xi32>
    %cst = arith.constant 0x7F800000 : f32
    %11 = vector.broadcast %cst : f32 to vector<8x512xf32>
    %12 = arith.select %10, %3, %11 : vector<8x512xi1>, vector<8x512xf32>
    %cst_3 = arith.constant 0xFF800000 : f32
    %13 = vector.broadcast %cst_3 : f32 to vector<8x512xf32>
    %14 = arith.select %10, %3, %13 : vector<8x512xi1>, vector<8x512xf32>
    %15 = vector.shape_cast %12 : vector<8x512xf32> to vector<1x8x512xf32>
    %cst_4 = arith.constant dense<0x7F800000> : vector<8x512xf32>
    %16 = vector.multi_reduction <minimumf>, %15, %cst_4 [0] : vector<1x8x512xf32> to vector<8x512xf32>
    %17 = vector.shape_cast %14 : vector<8x512xf32> to vector<1x8x512xf32>
    %cst_5 = arith.constant dense<0xFF800000> : vector<8x512xf32>
    %18 = vector.multi_reduction <maximumf>, %17, %cst_5 [0] : vector<1x8x512xf32> to vector<8x512xf32>
    %c0_6 = arith.constant 0 : index
    %c0_7 = arith.constant 0 : index
    %19 = vector.load %arg3[%c0_6, %c0_7] : memref<8x512xf32, #tpu.memory_space<vmem>>, vector<8x512xf32>
    %20 = arith.minimumf %19, %16 : vector<8x512xf32>
    %c0_8 = arith.constant 0 : index
    %c0_9 = arith.constant 0 : index
    %21 = vector.load %arg3[%c0_8, %c0_9] : memref<8x512xf32, #tpu.memory_space<vmem>>, vector<8x512xf32>
    tpu.vector_store %arg3[%c0_8, %c0_9], %20 {strides = array<i32>} : memref<8x512xf32, #tpu.memory_space<vmem>>, vector<8x512xf32>,
    %c0_10 = arith.constant 0 : index
    %c0_11 = arith.constant 0 : index
    %22 = vector.load %arg4[%c0_10, %c0_11] : memref<8x512xf32, #tpu.memory_space<vmem>>, vector<8x512xf32>
    %23 = arith.maximumf %22, %18 : vector<8x512xf32>
    %c0_12 = arith.constant 0 : index
    %c0_13 = arith.constant 0 : index
    %24 = vector.load %arg4[%c0_12, %c0_13] : memref<8x512xf32, #tpu.memory_space<vmem>>, vector<8x512xf32>
    tpu.vector_store %arg4[%c0_12, %c0_13], %23 {strides = array<i32>} : memref<8x512xf32, #tpu.memory_space<vmem>>, vector<8x512xf32>,
    return
  }
  func.func @transform_0(%arg0: i32, %arg1: i32) -> (i32, i32) {
    %c0_i32 = arith.constant 0 : i32
    %0 = arith.muli %arg0, %c0_i32 : i32
    %1 = arith.addi %0, %arg1 : i32
    %c0_i32_0 = arith.constant 0 : i32
    %c0_i32_1 = arith.constant 0 : i32
    return %1, %c0_i32_0 : i32, i32
  }
  func.func @transform_1(%arg0: i32, %arg1: i32) -> (i32, i32) {
    %c0_i32 = arith.constant 0 : i32
    %c0_i32_0 = arith.constant 0 : i32
    return %arg0, %c0_i32 : i32, i32
  }
  func.func @transform_2(%arg0: i32, %arg1: i32) -> (i32, i32) {
    %c0_i32 = arith.constant 0 : i32
    %c0_i32_0 = arith.constant 0 : i32
    return %arg0, %c0_i32 : i32, i32
  }
}

</mosaic_0001>

<llo_original>
// kernel: tpu_custom_call.1
$region0: #{tpu_custom_call.1}
  #allocation0 [shape = 'u32[]', space=smem, size = 0x4, offset = 0x4, fixed_abs, tag = 'smem constant byte address 0x4 - core index']
  #allocation1 [shape = 'u32[72,128]{1,0:T(1,128)}', space=vmem, size = 0x9000, scoped, tag = 'internal scratch']
  %s0 = inlined_call_operand.hbm [shape: f32[4,512], index: 0, kind: input, shape index: {}]
  %s1 = inlined_call_operand.hbm [shape: f32[16,512], index: 1, kind: output, shape index: {0}]
  %s2 = inlined_call_operand.hbm [shape: f32[16,512], index: 2, kind: output, shape index: {1}]
  %3 = xla_tuple %s1, %s2
  %s4 = sld [smem:[#allocation0]]
  $region53: #{tpu_custom_call.1} parent=0
    _
  %s6 = ssub.s32 1, %s4
  %s7 = scalar_select 0, %s6, %s4
  $region1: #{tpu_custom_call.1} parent=0
    #allocation2 [shape = 'u8[16384]{0}', space=vmem, size = 0x4000, scoped, tag = 'input window, operand 0, single buffered']
    #allocation3 [shape = 's32[2]{0}', space=sflag, size = 0x8, scoped, tag = 'scoped memory for tpu_custom_call.1']
    #allocation4 [shape = 's32[2]{0}', space=sflag, size = 0x8, scoped, tag = 'scoped memory for tpu_custom_call.1']
    #allocation5 [shape = 'u8[32768]{0}', space=vmem, size = 0x8000, scoped, tag = 'output window, operand 0']
    #allocation6 [shape = 'u8[32768]{0}', space=vmem, size = 0x8000, scoped, tag = 'output window, operand 1']
    #allocation7 [shape = 's32[2]{0}', space=sflag, size = 0x8, scoped, tag = 'scoped memory for tpu_custom_call.1']
    %8 = vsyncpa [#allocation3], 0
    %9 = vsyncpa [#allocation4], 0
    %s10 = scalar_lea.sflag [#allocation4], 1
    %11 = vsyncpa %s10, 0
    %12 = vsyncpa [#allocation7], 0
    %s13 = scalar_lea.sflag [#allocation7], 1
    %14 = vsyncpa %s13, 0
    loop: start=0, step=1, limit=4
    $region2: #{tpu_custom_call.1} parent=1 // loop_pre_header
      _
    $region3: #{tpu_custom_call.1} parent=1 // loop_header
      %s16 = sphi 0, %s20
      %p17 = scmp.ge.s32.totalorder %s16, 4
      %s23 = sphi 0, %s35
      %s24 = sphi 0, %s31
      %s25 = sphi 0, %s23
      %s26 = sphi 0, %s24
      %s27 = sphi 0, %s25
      %s28 = sphi 0, %s26
      %s38 = sphi 0, %s40
      %s41 = sphi 0, %s38
      %s42 = sphi 0, %s41
      %s58 = sphi 0, %s42
      %s64 = sphi 0, %s66
      %s67 = sphi 0, %s64
      %s68 = sphi 0, %s67
      %s84 = sphi 0, %s68
      %s90 = sphi 0, %s92
      %s93 = sphi 0, %s90
      %s94 = sphi 0, %s93
      %s110 = sphi 0, %s94
    $region4: #{tpu_custom_call.1} parent=1 // loop_header_branch
      %19 = sbr.rel (%p17) target = $region8
    $region5: #{tpu_custom_call.1} parent=1 // loop_body
      %s21 = ssub.s32 %s16, 1
      %s22 = ssub.s32 %s16, 2
      %s29 = sadd.s32 1, %s24
      %p30 = scmp.ge.s32.totalorder %s29, 1
      %s31 = scalar_select %p30, 0, %s29
      %s32 = sadd.s32 1, %s23
      %s33 = scalar_select %p30, %s32, %s23
      %p34 = scmp.ge.s32.totalorder %s33, 2
      %s35 = scalar_select %p34, 0, %s33
      %s36 = ssub.s32 %s24, %s31
      %p37 = scmp.eq.s32.totalorder %s36, 0
      %s39 = sadd.s32 %s38, 1
      %s40 = scalar_select %p37, %s38, %s39
      %p43 = pneg %p37
      %p44 = scmp.eq.s32.totalorder %s16, 1
      %p45 = por %p43, %p44
      %p46 = scmp.ne.s32.totalorder %s38, %s41
      %p47 = scmp.eq.s32.totalorder %s16, 0
      %p48 = por %p46, %p47
      %p49 = scmp.ne.s32.totalorder %s38, %s41
      %p50 = scmp.eq.s32.totalorder %s21, 1
      %p51 = por %p49, %p50
      %p52 = scmp.ne.s32.totalorder %s41, %s42
      %p53 = scmp.eq.s32.totalorder %s21, 0
      %p54 = por %p52, %p53
      %p55 = scmp.ne.s32.totalorder %s41, %s42
      %p56 = scmp.eq.s32.totalorder %s22, 1
      %p57 = por %p55, %p56
      %p59 = scmp.ne.s32.totalorder %s42, %s58
      %p60 = scmp.eq.s32.totalorder %s22, 0
      %p61 = por %p59, %p60
      %s62 = ssub.s32 %s23, %s35
      %p63 = scmp.eq.s32.totalorder %s62, 0
      %s65 = sadd.s32 %s64, 1
      %s66 = scalar_select %p63, %s64, %s65
      %p69 = pneg %p63
      %p70 = scmp.eq.s32.totalorder %s16, 1
      %p71 = por %p69, %p70
      %p72 = scmp.ne.s32.totalorder %s64, %s67
      %p73 = scmp.eq.s32.totalorder %s16, 0
      %p74 = por %p72, %p73
      %p75 = scmp.ne.s32.totalorder %s64, %s67
      %p76 = scmp.eq.s32.totalorder %s21, 1
      %p77 = por %p75, %p76
      %p78 = scmp.ne.s32.totalorder %s67, %s68
      %p79 = scmp.eq.s32.totalorder %s21, 0
      %p80 = por %p78, %p79
      %p81 = scmp.ne.s32.totalorder %s67, %s68
      %p82 = scmp.eq.s32.totalorder %s22, 1
      %p83 = por %p81, %p82
      %p85 = scmp.ne.s32.totalorder %s68, %s84
      %p86 = scmp.eq.s32.totalorder %s22, 0
      %p87 = por %p85, %p86
      %s88 = ssub.s32 %s23, %s35
      %p89 = scmp.eq.s32.totalorder %s88, 0
      %s91 = sadd.s32 %s90, 1
      %s92 = scalar_select %p89, %s90, %s91
      %p95 = pneg %p89
      %p96 = scmp.eq.s32.totalorder %s16, 1
      %p97 = por %p95, %p96
      %p98 = scmp.ne.s32.totalorder %s90, %s93
      %p99 = scmp.eq.s32.totalorder %s16, 0
      %p100 = por %p98, %p99
      %p101 = scmp.ne.s32.totalorder %s90, %s93
      %p102 = scmp.eq.s32.totalorder %s21, 1
      %p103 = por %p101, %p102
      %p104 = scmp.ne.s32.totalorder %s93, %s94
      %p105 = scmp.eq.s32.totalorder %s21, 0
      %p106 = por %p104, %p105
      %p107 = scmp.ne.s32.totalorder %s93, %s94
      %p108 = scmp.eq.s32.totalorder %s22, 1
      %p109 = por %p107, %p108
      %p111 = scmp.ne.s32.totalorder %s94, %s110
      %p112 = scmp.eq.s32.totalorder %s22, 0
      %p113 = por %p111, %p112
      %p114 = scmp.le.s32.totalorder 1, %s16
      %p115 = scmp.lt.s32.totalorder %s16, 3
      %p116 = pnand %p114, %p115
      %p117 = pneg %p116
      // Predicated region
      $region9: #{tpu_custom_call.1} parent=5 // pred_check
        _
      $region10: #{tpu_custom_call.1} parent=5 // pred_check_branch
        %119 = sbr.rel (%p116) target = $region12
      $region11: #{tpu_custom_call.1} parent=5 // pred_region
        %s120 = ssub.s32 %s16, 1
        // Predicated region
        $region13: #{tpu_custom_call.1} parent=11 // pred_check
          %p121 = pneg %p54
        $region14: #{tpu_custom_call.1} parent=11 // pred_check_branch
          %123 = sbr.rel (%p121) target = $region16
        $region15: #{tpu_custom_call.1} parent=11 // pred_region
          %s124 = smul.u32 2, %s26
          %s125 = ssub.s32 1, %s124
          %s126 = smul.u32 4, %s125
          %s127 = smul.u32 %s126, 4
          %s128 = ssub.s32 32, %s127
          %s129 = sshll.u32 %s128, 4
          %130 = vsyncadd [#allocation3], %s129
          %p131 = scmp.ne.s32.totalorder 0, %s127
          %s132 = smul.addr %s124, 4
          %s133 = smul.addr %s132, 4
          %s134 = scalar_lea.hbm %s0, %s133
          %s135 = smul.u32 16, %s125
          %s136 = sshll.u32 %s134, 4
          %s137 = int_to_ptr.hbm [resolvable:$true] %s136
          %s138 = sshll.u32 [#allocation2], 4
          %s139 = int_to_ptr.vmem [resolvable:$true] %s138
          %s140 = sshll.u32 %s135, 4
          %144 = dma.hbm_to_vmem [thread:$0]  (%p131), %s137, %s140, %s139, [#allocation3], 256, 256, 16
        $region16: #{tpu_custom_call.1} parent=11 // pred_fallthru
          _
      $region12: #{tpu_custom_call.1} parent=5 // pred_fallthru
        _
      %p145 = scmp.lt.s32.totalorder %s16, 2
      // Predicated region
      $region17: #{tpu_custom_call.1} parent=5 // pred_check
        %p146 = pneg %p145
      $region18: #{tpu_custom_call.1} parent=5 // pred_check_branch
        %148 = sbr.rel (%p146) target = $region20
      $region19: #{tpu_custom_call.1} parent=5 // pred_region
        _
      $region20: #{tpu_custom_call.1} parent=5 // pred_fallthru
        _
      %p149 = scmp.le.s32.totalorder 1, %s16
      %p150 = scmp.lt.s32.totalorder %s16, 3
      %p151 = pnand %p149, %p150
      %p152 = pneg %p151
      // Predicated region
      $region21: #{tpu_custom_call.1} parent=5 // pred_check
        _
      $region22: #{tpu_custom_call.1} parent=5 // pred_check_branch
        %154 = sbr.rel (%p151) target = $region24
      $region23: #{tpu_custom_call.1} parent=5 // pred_region
        %s155 = ssub.s32 %s16, 1
        // Predicated region
        $region25: #{tpu_custom_call.1} parent=23 // pred_check
          %p156 = pneg %p54
        $region26: #{tpu_custom_call.1} parent=23 // pred_check_branch
          %158 = sbr.rel (%p156) target = $region28
        $region27: #{tpu_custom_call.1} parent=23 // pred_region
          %160 = dma.done [#allocation3], 512
        $region28: #{tpu_custom_call.1} parent=23 // pred_fallthru
          _
        %p161 = pneg %p54
        %p162 = pneg %p51
        %p163 = pneg %p80
        %p164 = pneg %p77
        %s165 = sand.u32 %s67, 1
        %s166 = scalar_lea.sflag [#allocation4], %s165
        %s167 = sand.u32 %s67, 1
        %s168 = smul.addr %s167, 32
        %s169 = scalar_lea.vmem [#allocation5], %s168
        %p170 = pneg %p106
        %p171 = pneg %p103
        %s172 = sand.u32 %s93, 1
        %s173 = scalar_lea.sflag [#allocation7], %s172
        %s174 = sand.u32 %s93, 1
        %s175 = smul.addr %s174, 32
        %s176 = scalar_lea.vmem [#allocation6], %s175
        %s177 = smul.u32 2, %s26
        %s178 = ssub.s32 1, %s177
        %s179 = smul.u32 4, %s178
        %s180 = smul.u32 %s179, 4
        %p181 = scmp.eq.s32.totalorder %s26, 0
        // Predicated region
        $region29: #{tpu_custom_call.1} parent=23 // pred_check
          %p182 = pneg %p181
        $region30: #{tpu_custom_call.1} parent=23 // pred_check_branch
          %184 = sbr.rel (%p182) target = $region32
        $region31: #{tpu_custom_call.1} parent=23 // pred_region
          %185 = vst [vmem:[%s169] sm:$0xff] inf
          %186 = vst [vmem:[%s169 + $0x8] sm:$0xff] inf
          %187 = vst [vmem:[%s169 + $0x10] sm:$0xff] inf
          %188 = vst [vmem:[%s169 + $0x18] sm:$0xff] inf
          %189 = vst [vmem:[%s176] sm:$0xff] -inf
          %190 = vst [vmem:[%s176 + $0x8] sm:$0xff] -inf
          %191 = vst [vmem:[%s176 + $0x10] sm:$0xff] -inf
          %192 = vst [vmem:[%s176 + $0x18] sm:$0xff] -inf
        $region32: #{tpu_custom_call.1} parent=23 // pred_fallthru
          _
        %v193 = vld [vmem:[#allocation2] sm:$0xff]
        %v194 = vld [vmem:[#allocation2 + $0x8] sm:$0xff]
        %v195 = vld [vmem:[#allocation2 + $0x10] sm:$0xff]
        %v196 = vld [vmem:[#allocation2 + $0x18] sm:$0xff]
        %s197 = smul.u32 %s26, 8
        %s198 = ssub.s32 4, %s197
        %v199 = vlaneseq
        %v200 = vshrl.u32 %v199, 7
        %v201 = vstv %s198
        %vm202 = vcmp.lt.s32.totalorder %v200, %v201
        %207 = vst [vmem:[#allocation1] ss:$2 sm:$0xff] %v193
        %s208 = scalar_lea.vmem [#allocation1], 1
        %209 = vst [vmem:[%s208] ss:$2 sm:$0xff] %v195
        %s210 = scalar_lea.vmem [#allocation1], 16
        %211 = vst [vmem:[%s210] ss:$2 sm:$0xff] %v194
        %s212 = scalar_lea.vmem [#allocation1], 17
        %213 = vst [vmem:[%s212] ss:$2 sm:$0xff] %v196
        %v214 = vld.sshfl [vmem:[#allocation1] sm:$0xff pattern:$0x75316420]
        %v215 = vld.sshfl [vmem:[#allocation1 + $0x8] sm:$0xff pattern:$0x75316420]
        %v216 = vld.sshfl [vmem:[#allocation1 + $0x10] sm:$0xff pattern:$0x75316420]
        %v217 = vld.sshfl [vmem:[#allocation1 + $0x18] sm:$0xff pattern:$0x75316420]
        %v222 = vsel %vm202, %v214, inf
        %v223 = vsel %vm202, %v215, inf
        %v224 = vsel %vm202, %v216, inf
        %v225 = vsel %vm202, %v217, inf
        %226 = vst [vmem:[#allocation1] ss:$2 sm:$0xff] %v193
        %s227 = scalar_lea.vmem [#allocation1], 1
        %228 = vst [vmem:[%s227] ss:$2 sm:$0xff] %v195
        %s229 = scalar_lea.vmem [#allocation1], 16
        %230 = vst [vmem:[%s229] ss:$2 sm:$0xff] %v194
        %s231 = scalar_lea.vmem [#allocation1], 17
        %232 = vst [vmem:[%s231] ss:$2 sm:$0xff] %v196
        %v233 = vld.sshfl [vmem:[#allocation1] sm:$0xff pattern:$0x75316420]
        %v234 = vld.sshfl [vmem:[#allocation1 + $0x8] sm:$0xff pattern:$0x75316420]
        %v235 = vld.sshfl [vmem:[#allocation1 + $0x10] sm:$0xff pattern:$0x75316420]
        %v236 = vld.sshfl [vmem:[#allocation1 + $0x18] sm:$0xff pattern:$0x75316420]
        %v241 = vsel %vm202, %v233, -inf
        %v242 = vsel %vm202, %v234, -inf
        %v243 = vsel %vm202, %v235, -inf
        %v244 = vsel %vm202, %v236, -inf
        %v245 = vld [vmem:[%s169] sm:$0xff]
        %v246 = vld [vmem:[%s169 + $0x8] sm:$0xff]
        %v247 = vld [vmem:[%s169 + $0x10] sm:$0xff]
        %v248 = vld [vmem:[%s169 + $0x18] sm:$0xff]
        %v249 = vmin.f32 %v245, %v222
        %v250 = vmin.f32 %v246, %v223
        %v251 = vmin.f32 %v247, %v224
        %v252 = vmin.f32 %v248, %v225
        %253 = vst [vmem:[%s169] sm:$0xff] %v249
        %254 = vst [vmem:[%s169 + $0x8] sm:$0xff] %v250
        %255 = vst [vmem:[%s169 + $0x10] sm:$0xff] %v251
        %256 = vst [vmem:[%s169 + $0x18] sm:$0xff] %v252
        %v257 = vld [vmem:[%s176] sm:$0xff]
        %v258 = vld [vmem:[%s176 + $0x8] sm:$0xff]
        %v259 = vld [vmem:[%s176 + $0x10] sm:$0xff]
        %v260 = vld [vmem:[%s176 + $0x18] sm:$0xff]
        %v261 = vmax.f32 %v257, %v241
        %v262 = vmax.f32 %v258, %v242
        %v263 = vmax.f32 %v259, %v243
        %v264 = vmax.f32 %v260, %v244
        %265 = vst [vmem:[%s176] sm:$0xff] %v261
        %266 = vst [vmem:[%s176 + $0x8] sm:$0xff] %v262
        %267 = vst [vmem:[%s176 + $0x10] sm:$0xff] %v263
        %268 = vst [vmem:[%s176 + $0x18] sm:$0xff] %v264
        %s269 = sand.u32 %s67, 1
        %s270 = scalar_lea.sflag [#allocation4], %s269
        %s271 = sand.u32 %s67, 1
        %s272 = smul.addr %s271, 32
        %s273 = scalar_lea.vmem [#allocation5], %s272
        %s274 = sand.u32 %s93, 1
        %s275 = scalar_lea.sflag [#allocation7], %s274
        %s276 = sand.u32 %s93, 1
        %s277 = smul.addr %s276, 32
        %s278 = scalar_lea.vmem [#allocation6], %s277
        // Predicated region
        $region33: #{tpu_custom_call.1} parent=23 // pred_check
          %p279 = pneg %p77
        $region34: #{tpu_custom_call.1} parent=23 // pred_check_branch
          %281 = sbr.rel (%p279) target = $region36
        $region35: #{tpu_custom_call.1} parent=23 // pred_region
          %283 = vsyncadd %s270, 0
          %s284 = smul.addr %s25, 4
          %s285 = smul.addr %s284, 8
          %s286 = scalar_lea.hbm %s1, %s285
          %s288 = sshll.u32 %s273, 4
          %s289 = int_to_ptr.vmem [resolvable:$true] %s288
          %s290 = sshll.u32 %s286, 4
          %s291 = int_to_ptr.hbm [resolvable:$true] %s290
          %293 = dma.vmem_to_hbm [thread:$0]  %s289, 512, %s291, %s270
        $region36: #{tpu_custom_call.1} parent=23 // pred_fallthru
          _
        // Predicated region
        $region37: #{tpu_custom_call.1} parent=23 // pred_check
          %p294 = pneg %p103
        $region38: #{tpu_custom_call.1} parent=23 // pred_check_branch
          %296 = sbr.rel (%p294) target = $region40
        $region39: #{tpu_custom_call.1} parent=23 // pred_region
          %298 = vsyncadd %s275, 0
          %s299 = smul.addr %s25, 4
          %s300 = smul.addr %s299, 8
          %s301 = scalar_lea.hbm %s2, %s300
          %s303 = sshll.u32 %s278, 4
          %s304 = int_to_ptr.vmem [resolvable:$true] %s303
          %s305 = sshll.u32 %s301, 4
          %s306 = int_to_ptr.hbm [resolvable:$true] %s305
          %308 = dma.vmem_to_hbm [thread:$0]  %s304, 512, %s306, %s275
        $region40: #{tpu_custom_call.1} parent=23 // pred_fallthru
          _
      $region24: #{tpu_custom_call.1} parent=5 // pred_fallthru
        _
      %p309 = scmp.le.s32.totalorder 2, %s16
      // Predicated region
      $region41: #{tpu_custom_call.1} parent=5 // pred_check
        %p310 = pneg %p309
      $region42: #{tpu_custom_call.1} parent=5 // pred_check_branch
        %312 = sbr.rel (%p310) target = $region44
      $region43: #{tpu_custom_call.1} parent=5 // pred_region
        %s313 = ssub.s32 %s16, 2
        // Predicated region
        $region45: #{tpu_custom_call.1} parent=43 // pred_check
          %p314 = pneg %p83
        $region46: #{tpu_custom_call.1} parent=43 // pred_check_branch
          %316 = sbr.rel (%p314) target = $region48
        $region47: #{tpu_custom_call.1} parent=43 // pred_region
          %s317 = sand.u32 %s68, 1
          %s318 = scalar_lea.sflag [#allocation4], %s317
          %s319 = sand.u32 %s68, 1
          %s320 = smul.addr %s319, 32
          %s321 = scalar_lea.vmem [#allocation5], %s320
          %323 = dma.done %s318, 512
        $region48: #{tpu_custom_call.1} parent=43 // pred_fallthru
          _
        // Predicated region
        $region49: #{tpu_custom_call.1} parent=43 // pred_check
          %p324 = pneg %p109
        $region50: #{tpu_custom_call.1} parent=43 // pred_check_branch
          %326 = sbr.rel (%p324) target = $region52
        $region51: #{tpu_custom_call.1} parent=43 // pred_region
          %s327 = sand.u32 %s94, 1
          %s328 = scalar_lea.sflag [#allocation7], %s327
          %s329 = sand.u32 %s94, 1
          %s330 = smul.addr %s329, 32
          %s331 = scalar_lea.vmem [#allocation6], %s330
          %333 = dma.done %s328, 512
        $region52: #{tpu_custom_call.1} parent=43 // pred_fallthru
          _
      $region44: #{tpu_custom_call.1} parent=5 // pred_fallthru
        _
    $region6: #{tpu_custom_call.1} parent=1 // loop_footer
      %s20 = sadd.s32 1, %s16
    $region7: #{tpu_custom_call.1} parent=1 // loop_footer_branch
      %15 = sbr.rel target = $region3
    $region8: #{tpu_custom_call.1} parent=1 // loop_exit
      _
    %334 = vsyncpa [#allocation3], 1
    %s335 = scalar_lea.sflag [#allocation3], 1
    %336 = vsyncpa %s335, 1
    %337 = vsyncpa [#allocation4], 1
    %s338 = scalar_lea.sflag [#allocation4], 1
    %339 = vsyncpa %s338, 1
    %340 = vsyncpa [#allocation7], 1
    %s341 = scalar_lea.sflag [#allocation7], 1
    %342 = vsyncpa %s341, 1

</llo_original>
